<compile_context>
chip_gen: v7x
topology: tpu7x:2x2x1
jax: 0.10.0
libtpu: 0.0.40
codegen_flags: <defaults>
</compile_context>

<pallas_src>
import functools
import math

import jax
import jax.numpy as jnp
from jax.experimental import pallas as pl
from jax.experimental.pallas import tpu as pltpu

LOG_2PI = math.log(2.0 * math.pi)
LEAKY_SLOPE = 0.01      # torch.nn.functional.leaky_relu default negative_slope
HIDDEN = 128            # hidden width of the actor MLP
LANES = 128             # TPU lane width


def _round_up(n, m):
    return ((n + m - 1) // m) * m


def _policy_kernel(x_ref, eps_ref, p_ref, out_ref, *, obs_pad, act_dim):
    # Static slices of the packed parameter slab (zero-cost ref views, 8-row aligned).
    r = 0
    w1 = p_ref[r:r + obs_pad, :]; r += obs_pad           # (obs_pad, 128)
    b1 = p_ref[r:r + 1, :];       r += 8                 # (1, 128)
    w2 = p_ref[r:r + HIDDEN, :];  r += HIDDEN            # (128, 128)
    b2 = p_ref[r:r + 1, :];       r += 8                 # (1, 128)
    w3 = p_ref[r:r + HIDDEN, :];  r += HIDDEN            # (128, 128), cols >= act_dim are 0
    b3 = p_ref[r:r + 1, :];       r += 8                 # (1, 128),   cols >= act_dim are 0
    log_stds = p_ref[r:r + 1, :]                         # (1, 128),   cols >= act_dim are 0

    x = x_ref[...]        # (TB, obs_pad)  zero-padded cols
    eps = eps_ref[...]    # (TB, 128)      zero-padded cols

    # actor MLP: linear -> leaky_relu -> linear -> leaky_relu -> linear
    h = jnp.dot(x, w1, preferred_element_type=jnp.float32) + b1
    h = jnp.maximum(h, LEAKY_SLOPE * h)
    h = jnp.dot(h, w2, preferred_element_type=jnp.float32) + b2
    h = jnp.maximum(h, LEAKY_SLOPE * h)
    means = jnp.dot(h, w3, preferred_element_type=jnp.float32) + b3   # 0 beyond act_dim

    stds = jnp.exp(log_stds)          # (1, 128); == 1 in padded lanes (harmless: eps == 0 there)
    acts = means + stds * eps         # reparameterized torch.normal(means, stds)

    # Gaussian logp summed over the action dim, algebraically simplified:
    #   (acts - means)^2 / var == eps^2,   2*log(stds) == 2*log_stds.
    # Zero padding of eps / log_stds keeps the lane sums exact; the per-lane
    # constant becomes act_dim * log(2*pi).
    sq_sum = jnp.sum(eps * eps, axis=-1, keepdims=True)               # (TB, 1)
    ls_sum = jnp.sum(log_stds, axis=-1, keepdims=True)                # (1, 1)
    logp = -0.5 * (sq_sum + 2.0 * ls_sum + act_dim * LOG_2PI)         # (TB, 1)

    # lane-dense fused output: lanes [0, act_dim) = acts, lane act_dim = logp
    lane = jax.lax.broadcasted_iota(jnp.int32, acts.shape, 1)
    out_ref[...] = jnp.where(lane == act_dim, logp, acts)


def _pack_params(params, obs_pad):
    """Packs all actor parameters into one lane-dense (R, 128) f32 slab.

    Each segment is zero-padded to 128 lanes and to a multiple of 8 rows so all
    in-kernel slices are sublane-aligned.
    """
    def pad_block(a, n_rows):
        rr, cc = a.shape
        return jnp.zeros((n_rows, LANES), jnp.float32).at[:rr, :cc].set(a)

    return jnp.concatenate(
        [
            pad_block(params["w1"], obs_pad),
            pad_block(params["b1"], 8),
            pad_block(params["w2"], HIDDEN),
            pad_block(params["b2"], 8),
            pad_block(params["w3"], HIDDEN),
            pad_block(params["b3"], 8),
            pad_block(params["log_stds"], 8),
        ],
        axis=0,
    )


def continuous_policy_forward(x, params, eps):
    """forward(x, with_logp=True): returns (acts, logp)."""
    B, obs_dim = x.shape
    A = params["w3"].shape[1]
    assert A < LANES, "logp is stored in output lane `act_dim`; requires act_dim < 128"

    obs_pad = _round_up(obs_dim, 8)
    TB = min(256, _round_up(max(B, 1), 8))     # batch tile, multiple of 8 sublanes
    B_pad = _round_up(B, TB)

    # zero-pad activations to aligned, lane-dense shapes
    x_p = jnp.zeros((B_pad, obs_pad), jnp.float32).at[:B, :obs_dim].set(x)
    eps_p = jnp.zeros((B_pad, LANES), jnp.float32).at[:B, :A].set(eps)
    slab = _pack_params(params, obs_pad)        # single param DMA
    R = slab.shape[0]

    out = pl.pallas_call(
        functools.partial(_policy_kernel, obs_pad=obs_pad, act_dim=A),
        grid=(B_pad // TB,),
        in_specs=[
            pl.BlockSpec((TB, obs_pad), lambda i: (i, 0)),   # x tile
            pl.BlockSpec((TB, LANES), lambda i: (i, 0)),     # eps tile
            pl.BlockSpec((R, LANES), lambda i: (0, 0)),      # params, VMEM-resident
        ],
        out_specs=pl.BlockSpec((TB, LANES), lambda i: (i, 0)),
        out_shape=jax.ShapeDtypeStruct((B_pad, LANES), jnp.float32),
        compiler_params=pltpu.CompilerParams(
            dimension_semantics=("parallel",)),  # independent batch tiles (v7x megacore)
    )(x_p, eps_p, slab)

    acts = out[:B, :A]
    logp = out[:B, A]
    return acts, logp


def init_params(key, obs_dim, act_dim):
    """Deterministic init mimicking torch nn.Linear default (uniform +/- 1/sqrt(fan_in))."""
    def linear(k, fan_in, fan_out):
        kw, kb = jax.random.split(k)
        bound = 1.0 / math.sqrt(fan_in)
        w = jax.random.uniform(kw, (fan_in, fan_out), jnp.float32, -bound, bound)
        b = jax.random.uniform(kb, (1, fan_out), jnp.float32, -bound, bound)
        return w, b

    k1, k2, k3 = jax.random.split(key, 3)
    w1, b1 = linear(k1, obs_dim, HIDDEN)
    w2, b2 = linear(k2, HIDDEN, HIDDEN)
    w3, b3 = linear(k3, HIDDEN, act_dim)
    log_stds = jnp.full((1, act_dim), -0.5, dtype=jnp.float32)
    return dict(w1=w1, b1=b1, w2=w2, b2=b2, w3=w3, b3=b3, log_stds=log_stds)
    # TODO(synk): critic head (value / action_value / entropy) not exercised by the
    # default forward(); same matmul pattern, intentionally omitted from the kernel.


if __name__ == "__main__":
    B, OBS_DIM, ACT_DIM = 2, 16, 8

    key = jax.random.PRNGKey(0)
    k_params, k_x, k_eps = jax.random.split(key, 3)

    params = init_params(k_params, OBS_DIM, ACT_DIM)
    x = jax.random.normal(k_x, (B, OBS_DIM), dtype=jnp.float32)
    eps = jax.random.normal(k_eps, (B, ACT_DIM), dtype=jnp.float32)

    acts, logp = continuous_policy_forward(x, params, eps)
    jax.block_until_ready((acts, logp))

    # quick sanity check against a plain-JAX reference (original, unsimplified math)
    def ref(x, p, eps):
        lrelu = lambda v: jnp.where(v > 0, v, LEAKY_SLOPE * v)
        h = lrelu(x @ p["w1"] + p["b1"])
        h = lrelu(h @ p["w2"] + p["b2"])
        means = h @ p["w3"] + p["b3"]
        stds = jnp.exp(p["log_stds"])
        a = means + stds * eps
        lp = -0.5 * ((a - means) ** 2 / (stds ** 2) + 2 * jnp.log(stds) + LOG_2PI)
        return a, lp.sum(-1)

    ra, rl = ref(x, params, eps)
    assert jnp.allclose(acts, ra, atol=1e-5), "acts mismatch"
    assert jnp.allclose(logp, rl, atol=1e-4, rtol=1e-5), "logp mismatch"

    print("KERNEL_OK")
</pallas_src>

<mosaic_0001>
module attributes {stable_mosaic.version = 11 : i64} {
  func.func @_policy_kernel(%arg0: i32, %arg1: memref<8x16xf32, #tpu.memory_space<vmem>>, %arg2: memref<8x128xf32, #tpu.memory_space<vmem>>, %arg3: memref<304x128xf32, #tpu.memory_space<vmem>>, %arg4: memref<8x128xf32, #tpu.memory_space<vmem>>) attributes {dimension_semantics = [#tpu.dimension_semantics<parallel>], iteration_bounds = array<i64: 1>, scalar_prefetch = 0 : i64, scratch_operands = 0 : i64, tpu.core_type = #tpu.core_type<tc>, window_params = [{transform_indices = @transform_0, window_bounds = array<i64: 8, 16>}, {transform_indices = @transform_1, window_bounds = array<i64: 8, 128>}, {pipeline_mode = #tpu.pipeline_mode<synchronous>, transform_indices = @transform_2, window_bounds = array<i64: 304, 128>}, {transform_indices = @transform_3, window_bounds = array<i64: 8, 128>}]} {
    %c0 = arith.constant 0 : index
    %c0_0 = arith.constant 0 : index
    %0 = vector.load %arg3[%c0, %c0_0] : memref<304x128xf32, #tpu.memory_space<vmem>>, vector<16x128xf32>
    %c16 = arith.constant 16 : index
    %c0_1 = arith.constant 0 : index
    %1 = vector.load %arg3[%c16, %c0_1] : memref<304x128xf32, #tpu.memory_space<vmem>>, vector<1x128xf32>
    %c24 = arith.constant 24 : index
    %c0_2 = arith.constant 0 : index
    %2 = vector.load %arg3[%c24, %c0_2] : memref<304x128xf32, #tpu.memory_space<vmem>>, vector<128x128xf32>
    %c152 = arith.constant 152 : index
    %c0_3 = arith.constant 0 : index
    %3 = vector.load %arg3[%c152, %c0_3] : memref<304x128xf32, #tpu.memory_space<vmem>>, vector<1x128xf32>
    %c160 = arith.constant 160 : index
    %c0_4 = arith.constant 0 : index
    %4 = vector.load %arg3[%c160, %c0_4] : memref<304x128xf32, #tpu.memory_space<vmem>>, vector<128x128xf32>
    %c288 = arith.constant 288 : index
    %c0_5 = arith.constant 0 : index
    %5 = vector.load %arg3[%c288, %c0_5] : memref<304x128xf32, #tpu.memory_space<vmem>>, vector<1x128xf32>
    %c296 = arith.constant 296 : index
    %c0_6 = arith.constant 0 : index
    %6 = vector.load %arg3[%c296, %c0_6] : memref<304x128xf32, #tpu.memory_space<vmem>>, vector<1x128xf32>
    %c0_7 = arith.constant 0 : index
    %c0_8 = arith.constant 0 : index
    %7 = vector.load %arg1[%c0_7, %c0_8] : memref<8x16xf32, #tpu.memory_space<vmem>>, vector<8x16xf32>
    %c0_9 = arith.constant 0 : index
    %c0_10 = arith.constant 0 : index
    %8 = vector.load %arg2[%c0_9, %c0_10] : memref<8x128xf32, #tpu.memory_space<vmem>>, vector<8x128xf32>
    %cst = arith.constant dense<0.000000e+00> : vector<8x128xf32>
    %9 = tpu.matmul %7, %0, %cst {dimension_numbers = #tpu.dot_dimension_numbers<[1], [0], [0], [1], [0, 0, 1, 1], [], []>} : vector<8x16xf32>, vector<16x128xf32>, vector<8x128xf32> -> vector<8x128xf32>
    %10 = vector.broadcast %1 : vector<1x128xf32> to vector<8x128xf32>
    %11 = arith.addf %9, %10 : vector<8x128xf32>
    %cst_11 = arith.constant 0.00999999977 : f32
    %12 = vector.broadcast %cst_11 : f32 to vector<8x128xf32>
    %13 = arith.mulf %12, %11 : vector<8x128xf32>
    %14 = arith.maximumf %11, %13 : vector<8x128xf32>
    %cst_12 = arith.constant dense<0.000000e+00> : vector<8x128xf32>
    %15 = tpu.matmul %14, %2, %cst_12 {dimension_numbers = #tpu.dot_dimension_numbers<[1], [0], [0], [1], [0, 0, 1, 1], [], []>} : vector<8x128xf32>, vector<128x128xf32>, vector<8x128xf32> -> vector<8x128xf32>
    %16 = vector.broadcast %3 : vector<1x128xf32> to vector<8x128xf32>
    %17 = arith.addf %15, %16 : vector<8x128xf32>
    %cst_13 = arith.constant 0.00999999977 : f32
    %18 = vector.broadcast %cst_13 : f32 to vector<8x128xf32>
    %19 = arith.mulf %18, %17 : vector<8x128xf32>
    %20 = arith.maximumf %17, %19 : vector<8x128xf32>
    %cst_14 = arith.constant dense<0.000000e+00> : vector<8x128xf32>
    %21 = tpu.matmul %20, %4, %cst_14 {dimension_numbers = #tpu.dot_dimension_numbers<[1], [0], [0], [1], [0, 0, 1, 1], [], []>} : vector<8x128xf32>, vector<128x128xf32>, vector<8x128xf32> -> vector<8x128xf32>
    %22 = vector.broadcast %5 : vector<1x128xf32> to vector<8x128xf32>
    %23 = arith.addf %21, %22 : vector<8x128xf32>
    %24 = math.exp %6 : vector<1x128xf32>
    %25 = vector.broadcast %24 : vector<1x128xf32> to vector<8x128xf32>
    %26 = arith.mulf %25, %8 : vector<8x128xf32>
    %27 = arith.addf %23, %26 : vector<8x128xf32>
    %28 = arith.mulf %8, %8 : vector<8x128xf32>
    %cst_15 = arith.constant dense<0.000000e+00> : vector<8xf32>
    %29 = vector.multi_reduction <add>, %28, %cst_15 [1] : vector<8x128xf32> to vector<8xf32>
    %30 = vector.shape_cast %29 : vector<8xf32> to vector<8x1xf32>
    %cst_16 = arith.constant dense<0.000000e+00> : vector<1xf32>
    %31 = vector.multi_reduction <add>, %6, %cst_16 [1] : vector<1x128xf32> to vector<1xf32>
    %32 = vector.shape_cast %31 : vector<1xf32> to vector<1x1xf32>
    %cst_17 = arith.constant 2.000000e+00 : f32
    %33 = vector.broadcast %cst_17 : f32 to vector<1x1xf32>
    %34 = arith.mulf %33, %32 : vector<1x1xf32>
    %35 = vector.broadcast %34 : vector<1x1xf32> to vector<8x1xf32>
    %36 = arith.addf %30, %35 : vector<8x1xf32>
    %cst_18 = arith.constant 14.7030163 : f32
    %37 = vector.broadcast %cst_18 : f32 to vector<8x1xf32>
    %38 = arith.addf %36, %37 : vector<8x1xf32>
    %cst_19 = arith.constant -5.000000e-01 : f32
    %39 = vector.broadcast %cst_19 : f32 to vector<8x1xf32>
    %40 = arith.mulf %39, %38 : vector<8x1xf32>
    %41 = tpu.iota {dimensions = array<i32: 1>} : vector<8x128xi32>
    %c8_i32 = arith.constant 8 : i32
    %42 = vector.broadcast %c8_i32 : i32 to vector<8x128xi32>
    %43 = arith.cmpi eq, %41, %42 : vector<8x128xi32>
    %44 = vector.shape_cast %40 : vector<8x1xf32> to vector<8x1xf32>
    %45 = vector.broadcast %44 : vector<8x1xf32> to vector<8x128xf32>
    %46 = arith.select %43, %45, %27 : vector<8x128xi1>, vector<8x128xf32>
    %c0_20 = arith.constant 0 : index
    %c0_21 = arith.constant 0 : index
    %47 = vector.load %arg4[%c0_20, %c0_21] : memref<8x128xf32, #tpu.memory_space<vmem>>, vector<8x128xf32>
    tpu.vector_store %arg4[%c0_20, %c0_21], %46 {strides = array<i32>} : memref<8x128xf32, #tpu.memory_space<vmem>>, vector<8x128xf32>,
    return
  }
  func.func @transform_0(%arg0: i32) -> (i32, i32) {
    %c0_i32 = arith.constant 0 : i32
    %c0_i32_0 = arith.constant 0 : i32
    return %arg0, %c0_i32 : i32, i32
  }
  func.func @transform_1(%arg0: i32) -> (i32, i32) {
    %c0_i32 = arith.constant 0 : i32
    %c0_i32_0 = arith.constant 0 : i32
    return %arg0, %c0_i32 : i32, i32
  }
  func.func @transform_2(%arg0: i32) -> (i32, i32) {
    %c0_i32 = arith.constant 0 : i32
    %c0_i32_0 = arith.constant 0 : i32
    %c0_i32_1 = arith.constant 0 : i32
    return %c0_i32, %c0_i32_0 : i32, i32
  }
  func.func @transform_3(%arg0: i32) -> (i32, i32) {
    %c0_i32 = arith.constant 0 : i32
    %c0_i32_0 = arith.constant 0 : i32
    return %arg0, %c0_i32 : i32, i32
  }
}

</mosaic_0001>

<llo_original>
// kernel: tpu_custom_call.1
$region0: #{tpu_custom_call.1}
  #allocation0 [shape = 'u32[]', space=smem, size = 0x4, offset = 0x4, fixed_abs, tag = 'smem constant byte address 0x4 - core index']
  #allocation1 [shape = 'u32[144,128]{1,0:T(1,128)}', space=vmem, size = 0x12000, scoped, tag = 'internal scratch']
  %s0 = inlined_call_operand.hbm [shape: f32[8,16], index: 0, kind: input, shape index: {}]
  %s1 = inlined_call_operand.hbm [shape: f32[8,128], index: 1, kind: input, shape index: {}]
  %s2 = inlined_call_operand.hbm [shape: f32[304,128], index: 2, kind: input, shape index: {}]
  %s3 = inlined_call_operand.hbm [shape: f32[8,128], index: 3, kind: output, shape index: {}]
  %s4 = sld [smem:[#allocation0]]
  $region34: #{tpu_custom_call.1} parent=0
    _
  %s6 = ssub.s32 1, %s4
  %s7 = scalar_select 0, %s6, %s4
  $region1: #{tpu_custom_call.1} parent=0
    #allocation2 [shape = 'u8[4096]{0}', space=vmem, size = 0x1000, scoped, tag = 'input window, operand 0, single buffered']
    #allocation3 [shape = 's32[1]{0}', space=sflag, size = 0x4, scoped, tag = 'scoped memory for tpu_custom_call.1']
    #allocation4 [shape = 's32[1]{0}', space=sflag, size = 0x4, scoped, tag = 'scoped memory for tpu_custom_call.1']
    #allocation5 [shape = 'u8[4096]{0}', space=vmem, size = 0x1000, scoped, tag = 'input window, operand 1, single buffered']
    #allocation6 [shape = 's32[1]{0}', space=sflag, size = 0x4, scoped, tag = 'scoped memory for tpu_custom_call.1']
    #allocation7 [shape = 'u8[155648]{0}', space=vmem, size = 0x26000, scoped, tag = 'input window, operand 2, single buffered']
    #allocation8 [shape = 'u8[4096]{0}', space=vmem, size = 0x1000, scoped, tag = 'output window, operand 0, single buffered']
    %8 = vsyncpa [#allocation3], 0
    %9 = vsyncpa [#allocation6], 0
    %10 = vsyncpa [#allocation4], 0
    // Predicated region
    $region2: #{tpu_custom_call.1} parent=1 // pred_check
      _
    $region3: #{tpu_custom_call.1} parent=1 // pred_check_branch
      %12 = sbr.rel (0) target = $region5
    $region4: #{tpu_custom_call.1} parent=1 // pred_region
      %s14 = ssub.s32 128, 128
      %15 = vsyncadd [#allocation3], %s14
      %s17 = sshll.u32 [#allocation2], 4
      %s18 = int_to_ptr.vmem [resolvable:$true] %s17
      %20 = dma.hbm_to_vmem [thread:$0]  %s0, 128, %s18, [#allocation3]
    $region5: #{tpu_custom_call.1} parent=1 // pred_fallthru
      _
    // Predicated region
    $region6: #{tpu_custom_call.1} parent=1 // pred_check
      _
    $region7: #{tpu_custom_call.1} parent=1 // pred_check_branch
      %22 = sbr.rel (0) target = $region9
    $region8: #{tpu_custom_call.1} parent=1 // pred_region
      %s24 = ssub.s32 128, 128
      %25 = vsyncadd [#allocation6], %s24
      %s27 = sshll.u32 [#allocation5], 4
      %s28 = int_to_ptr.vmem [resolvable:$true] %s27
      %30 = dma.hbm_to_vmem [thread:$0]  %s1, 128, %s28, [#allocation6]
    $region9: #{tpu_custom_call.1} parent=1 // pred_fallthru
      _
    // Predicated region
    $region10: #{tpu_custom_call.1} parent=1 // pred_check
      _
    $region11: #{tpu_custom_call.1} parent=1 // pred_check_branch
      %32 = sbr.rel (0) target = $region13
    $region12: #{tpu_custom_call.1} parent=1 // pred_region
      %s34 = ssub.s32 4864, 4864
      %35 = vsyncadd [#allocation6], %s34
      %s36 = sshll.u32 [#allocation7], 4
      %s37 = int_to_ptr.vmem [resolvable:$true] %s36
      %42 = dma.hbm_to_vmem [thread:$0]  %s2, 4864, %s37, [#allocation6], 128, 128, 8
    $region13: #{tpu_custom_call.1} parent=1 // pred_fallthru
      _
    // Predicated region
    $region14: #{tpu_custom_call.1} parent=1 // pred_check
      _
    $region15: #{tpu_custom_call.1} parent=1 // pred_check_branch
      %44 = sbr.rel (0) target = $region17
    $region16: #{tpu_custom_call.1} parent=1 // pred_region
      %45 = dma.done [#allocation3], 128
    $region17: #{tpu_custom_call.1} parent=1 // pred_fallthru
      _
    // Predicated region
    $region18: #{tpu_custom_call.1} parent=1 // pred_check
      _
    $region19: #{tpu_custom_call.1} parent=1 // pred_check_branch
      %47 = sbr.rel (0) target = $region21
    $region20: #{tpu_custom_call.1} parent=1 // pred_region
      %48 = dma.done [#allocation6], 128
    $region21: #{tpu_custom_call.1} parent=1 // pred_fallthru
      _
    // Predicated region
    $region22: #{tpu_custom_call.1} parent=1 // pred_check
      _
    $region23: #{tpu_custom_call.1} parent=1 // pred_check_branch
      %50 = sbr.rel (0) target = $region25
    $region24: #{tpu_custom_call.1} parent=1 // pred_region
      %51 = dma.done [#allocation6], 4864
    $region25: #{tpu_custom_call.1} parent=1 // pred_fallthru
      _
    %v52 = vld [vmem:[#allocation7] sm:$0xff]
    %v53 = vld [vmem:[#allocation7 + $0x8] sm:$0xff]
    %v54 = vld [vmem:[#allocation7 + $0x10] sm:$0x1]
    %v55 = vld [vmem:[#allocation7 + $0x18] sm:$0xff]
    %v56 = vld [vmem:[#allocation7 + $0x20] sm:$0xff]
    %v57 = vld [vmem:[#allocation7 + $0x28] sm:$0xff]
    %v58 = vld [vmem:[#allocation7 + $0x30] sm:$0xff]
    %v59 = vld [vmem:[#allocation7 + $0x38] sm:$0xff]
    %v60 = vld [vmem:[#allocation7 + $0x40] sm:$0xff]
    %v61 = vld [vmem:[#allocation7 + $0x48] sm:$0xff]
    %v62 = vld [vmem:[#allocation7 + $0x50] sm:$0xff]
    %v63 = vld [vmem:[#allocation7 + $0x58] sm:$0xff]
    %v64 = vld [vmem:[#allocation7 + $0x60] sm:$0xff]
    %v65 = vld [vmem:[#allocation7 + $0x68] sm:$0xff]
    %v66 = vld [vmem:[#allocation7 + $0x70] sm:$0xff]
    %v67 = vld [vmem:[#allocation7 + $0x78] sm:$0xff]
    %v68 = vld [vmem:[#allocation7 + $0x80] sm:$0xff]
    %v69 = vld [vmem:[#allocation7 + $0x88] sm:$0xff]
    %v70 = vld [vmem:[#allocation7 + $0x90] sm:$0xff]
    %v71 = vld [vmem:[#allocation7 + $0x98] sm:$0x1]
    %v72 = vld [vmem:[#allocation7 + $0xa0] sm:$0xff]
    %v73 = vld [vmem:[#allocation7 + $0xa8] sm:$0xff]
    %v74 = vld [vmem:[#allocation7 + $0xb0] sm:$0xff]
    %v75 = vld [vmem:[#allocation7 + $0xb8] sm:$0xff]
    %v76 = vld [vmem:[#allocation7 + $0xc0] sm:$0xff]
    %v77 = vld [vmem:[#allocation7 + $0xc8] sm:$0xff]
    %v78 = vld [vmem:[#allocation7 + $0xd0] sm:$0xff]
    %v79 = vld [vmem:[#allocation7 + $0xd8] sm:$0xff]
    %v80 = vld [vmem:[#allocation7 + $0xe0] sm:$0xff]
    %v81 = vld [vmem:[#allocation7 + $0xe8] sm:$0xff]
    %v82 = vld [vmem:[#allocation7 + $0xf0] sm:$0xff]
    %v83 = vld [vmem:[#allocation7 + $0xf8] sm:$0xff]
    %v84 = vld [vmem:[#allocation7 + $0x100] sm:$0xff]
    %v85 = vld [vmem:[#allocation7 + $0x108] sm:$0xff]
    %v86 = vld [vmem:[#allocation7 + $0x110] sm:$0xff]
    %v87 = vld [vmem:[#allocation7 + $0x118] sm:$0xff]
    %v88 = vld [vmem:[#allocation7 + $0x120] sm:$0x1]
    %v89 = vld [vmem:[#allocation7 + $0x128] sm:$0x1]
    %v90 = vld [vmem:[#allocation2] sm:$0xff]
    %v91 = vld [vmem:[#allocation5] sm:$0xff]
    %v92 = vlaneseq
    %v93 = vshrl.u32 %v92, 7
    %v94 = vsub.s32 0, %v93
    %v95 = vrot.slane %v54, %v94
    %vm96 = vcmask 130048
    %v98 = vsel %vm96, %v90, 0
    %100 = vmatprep.subr.mxu0 0.0
    %101 = vmatpush1.msra.mxu0 %v52
    %102 = vmatprep.subr.mxu0 0.0
    %103 = vmatpush1.msra.mxu0 %v53
    %104 = vmatprep.subr.mxu0 0.0
    %105 = vmatpush1.msra.mxu0 0.0
    %106 = vmatprep.subr.mxu0 0.0
    %107 = vmatpush1.msra.mxu0 0.0
    %108 = vmatprep.subr.mxu0 0.0
    %109 = vmatpush1.msra.mxu0 0.0
    %110 = vmatprep.subr.mxu0 0.0
    %111 = vmatpush1.msra.mxu0 0.0
    %112 = vmatprep.subr.mxu0 0.0
    %113 = vmatpush1.msra.mxu0 0.0
    %114 = vmatprep.subr.mxu0 0.0
    %115 = vmatpush1.msra.mxu0 0.0
    %116 = vmatprep.subr.mxu0 0.0
    %117 = vmatpush1.msra.mxu0 0.0
    %118 = vmatprep.subr.mxu0 0.0
    %119 = vmatpush1.msra.mxu0 0.0
    %120 = vmatprep.subr.mxu0 0.0
    %121 = vmatpush1.msra.mxu0 0.0
    %122 = vmatprep.subr.mxu0 0.0
    %123 = vmatpush1.msra.mxu0 0.0
    %124 = vmatprep.subr.mxu0 0.0
    %125 = vmatpush1.msra.mxu0 0.0
    %126 = vmatprep.subr.mxu0 0.0
    %127 = vmatpush1.msra.mxu0 0.0
    %128 = vmatprep.subr.mxu0 0.0
    %129 = vmatpush1.msra.mxu0 0.0
    %130 = vmatprep.subr.mxu0 0.0
    %131 = vmatpush1.msra.mxu0 0.0
    %132 = vmatprep.subr.mxu0 0.0
    %133 = vmatpush1.msra.mxu0 0.0
    %134 = vmatprep.subr.mxu0 0.0
    %135 = vmatpush1.msra.mxu0 0.0
    %136 = vmatprep.subr.mxu0 0.0
    %137 = vmatpush1.msra.mxu0 0.0
    %138 = vmatprep.subr.mxu0 0.0
    %139 = vmatpush1.msra.mxu0 0.0
    %140 = vmatprep.subr.mxu0 0.0
    %141 = vmatpush1.msra.mxu0 0.0
    %142 = vmatprep.subr.mxu0 0.0
    %143 = vmatpush1.msra.mxu0 0.0
    %144 = vmatprep.subr.mxu0 0.0
    %145 = vmatpush1.msra.mxu0 0.0
    %146 = vmatprep.subr.mxu0 0.0
    %147 = vmatpush1.msra.mxu0 0.0
    %148 = vmatprep.subr.mxu0 0.0
    %149 = vmatpush1.msra.mxu0 0.0
    %150 = vmatprep.subr.mxu0 0.0
    %151 = vmatpush1.msra.mxu0 0.0
    %152 = vmatprep.subr.mxu0 0.0
    %153 = vmatpush1.msra.mxu0 0.0
    %154 = vmatprep.subr.mxu0 0.0
    %155 = vmatpush1.msra.mxu0 0.0
    %156 = vmatprep.subr.mxu0 0.0
    %157 = vmatpush1.msra.mxu0 0.0
    %158 = vmatprep.subr.mxu0 0.0
    %159 = vmatpush1.msra.mxu0 0.0
    %160 = vmatprep.subr.mxu0 0.0
    %161 = vmatpush1.msra.mxu0 0.0
    %162 = vmatprep.subr.mxu0 0.0
    %163 = vmatpush1.msra.mxu0 0.0
    %164 = vmatprep.mubr.f32.mxu0 0.0
    %165 = vmatmul.mubr.f32.gmra.mrb[0].mxu0 %v98
    %v166 = vpop.f32.mrb[0].mxu0
    %v167 = vadd.f32 %v95, %v166
    %v168 = vpop.f32.mrb[0].mxu0
    %169 = vdwg.mxu0
    %v170 = vmul.f32 %v167, 0.01
    %v171 = vmax.f32 %v167, %v170
    %v172 = vlaneseq
    %v173 = vshrl.u32 %v172, 7
    %v174 = vsub.s32 0, %v173
    %v175 = vrot.slane %v71, %v174
    %176 = vmatprep.subr.mxu0 0.0
    %177 = vmatpush1.msra.mxu0 %v55
    %178 = vmatprep.subr.mxu0 0.0
    %179 = vmatpush1.msra.mxu0 %v56
    %180 = vmatprep.subr.mxu0 0.0
    %181 = vmatpush1.msra.mxu0 %v57
    %182 = vmatprep.subr.mxu0 0.0
    %183 = vmatpush1.msra.mxu0 %v58
    %184 = vmatprep.subr.mxu0 0.0
    %185 = vmatpush1.msra.mxu0 %v59
    %186 = vmatprep.subr.mxu0 0.0
    %187 = vmatpush1.msra.mxu0 %v60
    %188 = vmatprep.subr.mxu0 0.0
    %189 = vmatpush1.msra.mxu0 %v61
    %190 = vmatprep.subr.mxu0 0.0
    %191 = vmatpush1.msra.mxu0 %v62
    %192 = vmatprep.subr.mxu0 0.0
    %193 = vmatpush1.msra.mxu0 %v63
    %194 = vmatprep.subr.mxu0 0.0
    %195 = vmatpush1.msra.mxu0 %v64
    %196 = vmatprep.subr.mxu0 0.0
    %197 = vmatpush1.msra.mxu0 %v65
    %198 = vmatprep.subr.mxu0 0.0
    %199 = vmatpush1.msra.mxu0 %v66
    %200 = vmatprep.subr.mxu0 0.0
    %201 = vmatpush1.msra.mxu0 %v67
    %202 = vmatprep.subr.mxu0 0.0
    %203 = vmatpush1.msra.mxu0 %v68
    %204 = vmatprep.subr.mxu0 0.0
    %205 = vmatpush1.msra.mxu0 %v69
    %206 = vmatprep.subr.mxu0 0.0
    %207 = vmatpush1.msra.mxu0 %v70
    %208 = vmatprep.subr.mxu0 0.0
    %209 = vmatpush1.msra.mxu0 0.0
    %210 = vmatprep.subr.mxu0 0.0
    %211 = vmatpush1.msra.mxu0 0.0
    %212 = vmatprep.subr.mxu0 0.0
    %213 = vmatpush1.msra.mxu0 0.0
    %214 = vmatprep.subr.mxu0 0.0
    %215 = vmatpush1.msra.mxu0 0.0
    %216 = vmatprep.subr.mxu0 0.0
    %217 = vmatpush1.msra.mxu0 0.0
    %218 = vmatprep.subr.mxu0 0.0
    %219 = vmatpush1.msra.mxu0 0.0
    %220 = vmatprep.subr.mxu0 0.0
    %221 = vmatpush1.msra.mxu0 0.0
    %222 = vmatprep.subr.mxu0 0.0
    %223 = vmatpush1.msra.mxu0 0.0
    %224 = vmatprep.subr.mxu0 0.0
    %225 = vmatpush1.msra.mxu0 0.0
    %226 = vmatprep.subr.mxu0 0.0
    %227 = vmatpush1.msra.mxu0 0.0
    %228 = vmatprep.subr.mxu0 0.0
    %229 = vmatpush1.msra.mxu0 0.0
    %230 = vmatprep.subr.mxu0 0.0
    %231 = vmatpush1.msra.mxu0 0.0
    %232 = vmatprep.subr.mxu0 0.0
    %233 = vmatpush1.msra.mxu0 0.0
    %234 = vmatprep.subr.mxu0 0.0
    %235 = vmatpush1.msra.mxu0 0.0
    %236 = vmatprep.subr.mxu0 0.0
    %237 = vmatpush1.msra.mxu0 0.0
    %238 = vmatprep.subr.mxu0 0.0
    %239 = vmatpush1.msra.mxu0 0.0
    %240 = vmatprep.mubr.f32.mxu0 0.0
    %241 = vmatmul.mubr.f32.gmra.mrb[0].mxu0 %v171
    %v242 = vpop.f32.mrb[0].mxu0
    %v243 = vadd.f32 %v175, %v242
    %v244 = vpop.f32.mrb[0].mxu0
    %245 = vdwg.mxu0
    %v246 = vmul.f32 %v243, 0.01
    %v247 = vmax.f32 %v243, %v246
    %v248 = vlaneseq
    %v249 = vshrl.u32 %v248, 7
    %v250 = vsub.s32 0, %v249
    %v251 = vrot.slane %v88, %v250
    %252 = vmatprep.subr.mxu0 0.0
    %253 = vmatpush1.msra.mxu0 %v72
    %254 = vmatprep.subr.mxu0 0.0
    %255 = vmatpush1.msra.mxu0 %v73
    %256 = vmatprep.subr.mxu0 0.0
    %257 = vmatpush1.msra.mxu0 %v74
    %258 = vmatprep.subr.mxu0 0.0
    %259 = vmatpush1.msra.mxu0 %v75
    %260 = vmatprep.subr.mxu0 0.0
    %261 = vmatpush1.msra.mxu0 %v76
    %262 = vmatprep.subr.mxu0 0.0
    %263 = vmatpush1.msra.mxu0 %v77
    %264 = vmatprep.subr.mxu0 0.0
    %265 = vmatpush1.msra.mxu0 %v78
    %266 = vmatprep.subr.mxu0 0.0
    %267 = vmatpush1.msra.mxu0 %v79
    %268 = vmatprep.subr.mxu0 0.0
    %269 = vmatpush1.msra.mxu0 %v80
    %270 = vmatprep.subr.mxu0 0.0
    %271 = vmatpush1.msra.mxu0 %v81
    %272 = vmatprep.subr.mxu0 0.0
    %273 = vmatpush1.msra.mxu0 %v82
    %274 = vmatprep.subr.mxu0 0.0
    %275 = vmatpush1.msra.mxu0 %v83
    %276 = vmatprep.subr.mxu0 0.0
    %277 = vmatpush1.msra.mxu0 %v84
    %278 = vmatprep.subr.mxu0 0.0
    %279 = vmatpush1.msra.mxu0 %v85
    %280 = vmatprep.subr.mxu0 0.0
    %281 = vmatpush1.msra.mxu0 %v86
    %282 = vmatprep.subr.mxu0 0.0
    %283 = vmatpush1.msra.mxu0 %v87
    %284 = vmatprep.subr.mxu0 0.0
    %285 = vmatpush1.msra.mxu0 0.0
    %286 = vmatprep.subr.mxu0 0.0
    %287 = vmatpush1.msra.mxu0 0.0
    %288 = vmatprep.subr.mxu0 0.0
    %289 = vmatpush1.msra.mxu0 0.0
    %290 = vmatprep.subr.mxu0 0.0
    %291 = vmatpush1.msra.mxu0 0.0
    %292 = vmatprep.subr.mxu0 0.0
    %293 = vmatpush1.msra.mxu0 0.0
    %294 = vmatprep.subr.mxu0 0.0
    %295 = vmatpush1.msra.mxu0 0.0
    %296 = vmatprep.subr.mxu0 0.0
    %297 = vmatpush1.msra.mxu0 0.0
    %298 = vmatprep.subr.mxu0 0.0
    %299 = vmatpush1.msra.mxu0 0.0
    %300 = vmatprep.subr.mxu0 0.0
    %301 = vmatpush1.msra.mxu0 0.0
    %302 = vmatprep.subr.mxu0 0.0
    %303 = vmatpush1.msra.mxu0 0.0
    %304 = vmatprep.subr.mxu0 0.0
    %305 = vmatpush1.msra.mxu0 0.0
    %306 = vmatprep.subr.mxu0 0.0
    %307 = vmatpush1.msra.mxu0 0.0
    %308 = vmatprep.subr.mxu0 0.0
    %309 = vmatpush1.msra.mxu0 0.0
    %310 = vmatprep.subr.mxu0 0.0
    %311 = vmatpush1.msra.mxu0 0.0
    %312 = vmatprep.subr.mxu0 0.0
    %313 = vmatpush1.msra.mxu0 0.0
    %314 = vmatprep.subr.mxu0 0.0
    %315 = vmatpush1.msra.mxu0 0.0
    %316 = vmatprep.mubr.f32.mxu0 0.0
    %317 = vmatmul.mubr.f32.gmra.mrb[0].mxu0 %v247
    %v318 = vpop.f32.mrb[0].mxu0
    %v319 = vadd.f32 %v251, %v318
    %v320 = vpop.f32.mrb[0].mxu0
    %321 = vdwg.mxu0
    %v322 = vmul.f32 %v89, 1.442695
    %v323 = vpow.pop %v322
    %v324 = vlaneseq
    %v325 = vshrl.u32 %v324, 7
    %v326 = vsub.s32 0, %v325
    %v327 = vrot.slane %v323, %v326
    %v328 = vmul.f32 %v327, %v91
    %v329 = vadd.f32 %v319, %v328
    %v330 = vmul.f32 %v91, %v91
    %331 = vadd.xlane.f32.xlu0 %v330
    %v332 = vpop.xlane.xlu0 %331
    %vm333 = vcmask 1040384
    %v334 = vsel %vm333, %v89, 0.0
    %335 = vadd.xlane.f32.xlu0 %v334
    %v336 = vpop.xlane.xlu0 %335
    %v337 = vmul.f32 %v336, 2.0
    %v338 = vlaneseq
    %v339 = vshrl.u32 %v338, 7
    %v340 = vsub.s32 0, %v339
    %v341 = vrot.slane %v337, %v340
    %v342 = vadd.f32 %v332, %v341
    %v343 = vadd.f32 %v342, 14.703016
    %v344 = vmul.f32 %v343, -0.5
    %v345 = vlaneseq
    %v346 = vand.u32 %v345, 127
    %vm347 = vcmp.eq.s32.totalorder %v346, 8
    %v348 = vsel %vm347, %v344, %v329
    %349 = vst [vmem:[#allocation8] sm:$0xff] %v348
    // Predicated region
    $region26: #{tpu_custom_call.1} parent=1 // pred_check
      _
    $region27: #{tpu_custom_call.1} parent=1 // pred_check_branch
      %351 = sbr.rel (0) target = $region29
    $region28: #{tpu_custom_call.1} parent=1 // pred_region
      %s353 = ssub.s32 128, 128
      %354 = vsyncadd [#allocation4], %s353
      %s356 = sshll.u32 [#allocation8], 4
      %s357 = int_to_ptr.vmem [resolvable:$true] %s356
      %359 = dma.vmem_to_hbm [thread:$0]  %s357, 128, %s3, [#allocation4]
    $region29: #{tpu_custom_call.1} parent=1 // pred_fallthru
      _
    // Predicated region
    $region30: #{tpu_custom_call.1} parent=1 // pred_check
      _
    $region31: #{tpu_custom_call.1} parent=1 // pred_check_branch
      %361 = sbr.rel (0) target = $region33
    $region32: #{tpu_custom_call.1} parent=1 // pred_region
      %362 = dma.done [#allocation4], 128
    $region33: #{tpu_custom_call.1} parent=1 // pred_fallthru
      _
    %363 = vsyncpa [#allocation3], 1
    %364 = vsyncpa [#allocation6], 1
    %365 = vsyncpa [#allocation4], 1

</llo_original>
